<compile_context>
chip_gen: v6e
topology: v6e:2x2x1
jax: 0.10.0
libtpu: 0.0.40
codegen_flags: <defaults>
</compile_context>

<pallas_src>
import math
import functools

import jax
import jax.numpy as jnp
from jax.experimental import pallas as pl
from jax.experimental.pallas import tpu as pltpu


def _curricularface_kernel(*refs, s, balanced, block_c, n_c_sub):
  """One (B, block_c) slab of cosine logits -> margins -> online softmax-CE."""
  if balanced:
    (xn_ref, label_ref, ctm_ref, ft_ref, t_ref,
     w_ref, invcn_ref, logcf_ref,
     out_ref, m_s, se_s, zs_s) = refs
  else:
    (xn_ref, label_ref, ctm_ref, ft_ref, t_ref,
     w_ref, invcn_ref,
     out_ref, m_s, se_s, zs_s) = refs
    logcf_ref = None

  p = pl.program_id(0)          # class-range partition ("parallel" -> megacore)
  j = pl.program_id(1)          # C tile within the partition ("arbitrary")

  @pl.when(j == 0)
  def _init():
    m_s[...] = jnp.full_like(m_s, -jnp.inf)
    se_s[...] = jnp.zeros_like(se_s)
    zs_s[...] = jnp.zeros_like(zs_s)

  # Cosine logits for this tile: bf16 MXU matmul (f32 accumulate) on the raw
  # weight tile, scaled by wrapper-computed reciprocal column norms.
  cos = jnp.dot(xn_ref[...], w_ref[...],
                preferred_element_type=jnp.float32) * invcn_ref[...]
  cos = jnp.clip(cos, -1.0, 1.0)                                   # (B, TC)

  # Curriculum hard-example re-weighting + label-column scatter (fused).
  tn = t_ref[0, 0]                                                 # scalar (SMEM)
  ctm = ctm_ref[...]                                               # (B, 1)
  cos = jnp.where(cos > ctm, cos * (tn + cos), cos)
  col = jax.lax.broadcasted_iota(jnp.int32, cos.shape, 1)
  offset = (p * n_c_sub + j) * block_c
  onehot = col == (label_ref[...] - offset)                        # (B, TC)
  cos = jnp.where(onehot, ft_ref[...], cos)

  logits = cos * s
  if balanced:
    logits = logits + logcf_ref[...]                               # (1, TC)

  # Online softmax cross-entropy accumulation (per partition).
  m_prev = m_s[...]
  m_new = jnp.maximum(m_prev, jnp.max(logits, axis=1, keepdims=True))
  alpha = jnp.exp(m_prev - m_new)
  se_s[...] = alpha * se_s[...] + jnp.sum(
      jnp.exp(logits - m_new), axis=1, keepdims=True)
  zs_s[...] = zs_s[...] + jnp.sum(logits, axis=1, keepdims=True)
  m_s[...] = m_new

  @pl.when(j == n_c_sub - 1)
  def _finalize():
    # Lane-dense per-row partial state: lane0=max, lane1=sum-exp, lane2=sum-logits.
    lane = jax.lax.broadcasted_iota(jnp.int32, (m_s.shape[0], 128), 1)
    out_ref[0] = (jnp.where(lane == 0, m_s[...], 0.0)
                  + jnp.where(lane == 1, se_s[...], 0.0)
                  + jnp.where(lane == 2, zs_s[...], 0.0))


def _vmem_cap_bytes():
  kind = ""
  try:
    kind = jax.devices()[0].device_kind.lower()
  except Exception:
    pass
  if "v7" in kind:
    phys = 64 * 2**20          # v7x: 64 MiB per TensorCore
  elif any(v in kind for v in ("v4", "v5", "v6")):
    phys = 128 * 2**20
  else:
    phys = 64 * 2**20          # unknown generation: be conservative
  return phys - 16 * 2**20     # headroom for Mosaic internal scratch


def _vmem_estimate(B, D, block_c, balanced):
  b8 = max(8, ((B + 7) // 8) * 8)
  b16 = max(16, ((B + 15) // 16) * 16)
  est = 2 * D * block_c * 2                      # weight tiles (bf16, double-buffered)
  est += 2 * 8 * block_c * 4                     # inv_cn tiles ((1,bc) pads to 8 sublanes)
  if balanced:
    est += 2 * 8 * block_c * 4                   # log class-freq tiles
  est += 2 * b16 * D * 2                         # resident normalized x (bf16)
  est += 2 * 4 * b8 * 128 * 4                    # resident label/ctm/ft + output blocks
  est += 3 * b8 * 128 * 4                        # accumulator scratch
  est += 6 * b8 * block_c * 4                    # cos/onehot/logits/exp live slabs
  est += 2 * 2**20                               # slack
  return est


@functools.partial(jax.jit, static_argnames=("m", "s", "balanced", "block_c"))
def curricular_face_loss(embeddings, w, label, t, class_freq, *,
                         m=0.5, s=64.0, balanced=False, block_c=None):
  B, D = embeddings.shape
  D2, C = w.shape
  assert D == D2
  eps_smooth = 0.1

  cos_m, sin_m = math.cos(m), math.sin(m)
  threshold = math.cos(math.pi - m)
  mm = math.sin(math.pi - m) * m

  vmem_cap = _vmem_cap_bytes()

  if block_c is None:
    block_c = C   # TODO(synk): masked tail handling when C % 128 != 0
    for cand in (8192, 4096, 2048, 1024, 512, 256, 128):
      if C % cand == 0 and _vmem_estimate(B, D, cand, balanced) <= vmem_cap:
        block_c = cand
        break
  assert C % block_c == 0, "block_c must divide num_class"
  n_c = C // block_c
  n_par = 2 if (n_c >= 2 and n_c % 2 == 0) else 1   # split C over the TCs
  n_c_sub = n_c // n_par

  # ---- cheap wrapper-side prep (O(B*D) + one fused pass over w) ------------
  x = embeddings.astype(jnp.float32)
  xn = x / jnp.maximum(jnp.sqrt(jnp.sum(x * x, axis=1, keepdims=True)), 1e-12)
  xn_bf = xn.astype(jnp.bfloat16)                                  # MXU LHS

  w_bf = w.astype(jnp.bfloat16)                                    # weight stream
  # Reciprocal column norms of the bf16-rounded weights (hoisted out of the
  # kernel; fuses with the w -> bf16 cast under jit: w read from HBM once).
  inv_cn = 1.0 / jnp.maximum(
      jnp.sqrt(jnp.sum(jnp.square(w_bf.astype(jnp.float32)), axis=0,
                       keepdims=True)), 1e-12)                     # (1, C) f32

  label_i = label.astype(jnp.int32)
  label2d = label_i.reshape(B, 1)

  # Label-column cosine (same bf16-rounded operands / f32 accumulation as the
  # streamed matmul) -> margin terms + updated running t.
  wl = jnp.take(w_bf, label_i, axis=1).T.astype(jnp.float32)       # (B, D)
  target = jnp.clip(
      jnp.sum(xn_bf.astype(jnp.float32) * wl, axis=1)
      * jnp.take(inv_cn[0], label_i), -1.0, 1.0)                   # (B,)
  sin_t = jnp.sqrt(jnp.maximum(1.0 - target * target, 0.0))
  ctm = target * cos_m - sin_t * sin_m
  ft = jnp.where(target > threshold, ctm, target - mm)
  t_new = jnp.mean(target) * 0.01 + 0.99 * jnp.reshape(
      jnp.asarray(t, jnp.float32), ())

  ctm2d = ctm.reshape(B, 1)
  ft2d = ft.reshape(B, 1)
  t2d = t_new.reshape(1, 1)

  w_map = lambda p, j: (0, p * n_c_sub + j)
  res_map = lambda p, j: (0, 0)

  inputs = [xn_bf, label2d, ctm2d, ft2d, t2d, w_bf, inv_cn]
  in_specs = [
      pl.BlockSpec((B, D), res_map),                               # xn (bf16, resident)
      pl.BlockSpec((B, 1), res_map),                               # labels
      pl.BlockSpec((B, 1), res_map),                               # cos(theta_y + m)
      pl.BlockSpec((B, 1), res_map),                               # final target logit
      pl.BlockSpec(memory_space=pltpu.MemorySpace.SMEM),           # updated t (scalar)
      pl.BlockSpec((D, block_c), w_map),                           # weight tile
      pl.BlockSpec((1, block_c), w_map),                           # 1 / ||w_col||
  ]
  if balanced:
    log_cf = jnp.log(class_freq.astype(jnp.float32))               # (C,)
    inputs.append(log_cf.reshape(1, C))
    in_specs.append(pl.BlockSpec((1, block_c), w_map))

  kernel = functools.partial(
      _curricularface_kernel, s=float(s), balanced=balanced,
      block_c=block_c, n_c_sub=n_c_sub)

  vmem_limit = int(min(vmem_cap,
                       max(int(1.5 * _vmem_estimate(B, D, block_c, balanced)),
                           32 * 2**20)))

  part = pl.pallas_call(
      kernel,
      out_shape=jax.ShapeDtypeStruct((n_par, B, 128), jnp.float32),
      grid=(n_par, n_c_sub),
      in_specs=in_specs,
      out_specs=pl.BlockSpec((1, B, 128), lambda p, j: (p, 0, 0)),
      scratch_shapes=[pltpu.VMEM((B, 1), jnp.float32),   # running max
                      pltpu.VMEM((B, 1), jnp.float32),   # running sum-exp
                      pltpu.VMEM((B, 1), jnp.float32)],  # running sum-logits
      compiler_params=pltpu.CompilerParams(
          dimension_semantics=("parallel", "arbitrary"),
          vmem_limit_bytes=vmem_limit),
  )(*inputs)

  # ---- merge per-partition online-softmax states (one cheap LSE merge) -----
  m_p = part[:, :, 0]                                              # (P, B)
  se_p = part[:, :, 1]
  zs_p = part[:, :, 2]
  m_tot = jnp.max(m_p, axis=0)                                     # (B,)
  se_tot = jnp.sum(jnp.exp(m_p - m_tot[None, :]) * se_p, axis=0)
  zs_tot = jnp.sum(zs_p, axis=0)
  lse = m_tot + jnp.log(se_tot)

  label_logit = ft * s                                             # closed form
  if balanced:
    label_logit = label_logit + jnp.take(log_cf, label_i)
  nll_true = lse - label_logit
  nll_all = C * lse - zs_tot
  per_sample = (1.0 - eps_smooth) * nll_true + (eps_smooth / C) * nll_all
  loss = jnp.mean(per_sample)
  return loss, t_new


def reference_loss(embeddings, w, label, t, class_freq,
                   m=0.5, s=64.0, balanced=False):
  """Pure-JAX mirror of the PyTorch forward (same bf16/f32 numerics)."""
  cos_m, sin_m = math.cos(m), math.sin(m)
  threshold = math.cos(math.pi - m)
  mm = math.sin(math.pi - m) * m
  eps = 0.1

  x = embeddings.astype(jnp.float32)
  xn = x / jnp.maximum(jnp.linalg.norm(x, axis=1, keepdims=True), 1e-12)
  xb = xn.astype(jnp.bfloat16)
  wb = w.astype(jnp.bfloat16)
  wf = wb.astype(jnp.float32)
  inv_cn = 1.0 / jnp.maximum(
      jnp.sqrt(jnp.sum(wf * wf, axis=0, keepdims=True)), 1e-12)
  cos_theta = jnp.clip(
      jnp.dot(xb, wb, preferred_element_type=jnp.float32) * inv_cn, -1.0, 1.0)

  B, C = cos_theta.shape
  target = jnp.take_along_axis(cos_theta, label[:, None], axis=1)
  sin_t = jnp.sqrt(jnp.maximum(1.0 - target ** 2, 0.0))
  ctm = target * cos_m - sin_t * sin_m
  ft = jnp.where(target > threshold, ctm, target - mm)
  t_new = jnp.mean(target) * 0.01 + 0.99 * jnp.asarray(t, jnp.float32)

  cos_theta = jnp.where(cos_theta > ctm,
                        cos_theta * (t_new + cos_theta), cos_theta)
  onehot = jax.nn.one_hot(label, C, dtype=bool)
  cos_theta = jnp.where(onehot, ft, cos_theta)

  logits = cos_theta * s
  if balanced:
    logits = logits + jnp.log(class_freq.astype(jnp.float32))[None, :]

  logp = jax.nn.log_softmax(logits, axis=1)
  nll_true = -jnp.take_along_axis(logp, label[:, None], axis=1)
  nll_all = -jnp.sum(logp, axis=1, keepdims=True)
  per_sample = (1.0 - eps) * nll_true + (eps / C) * nll_all
  return jnp.mean(per_sample), jnp.reshape(t_new, ())


if __name__ == "__main__":
  B, D, C = 8, 128, 512          # batch, feat_dim, num_class
  key = jax.random.PRNGKey(0)
  k_emb, k_w, k_lbl, k_cf = jax.random.split(key, 4)

  embeddings = jax.random.normal(k_emb, (B, D), dtype=jnp.float32)
  w = 0.01 * jax.random.normal(k_w, (D, C), dtype=jnp.float32)   # std=0.01 init
  label = jax.random.randint(k_lbl, (B,), 0, C, dtype=jnp.int32)
  class_freq = jax.random.randint(k_cf, (C,), 1, 100).astype(jnp.float32)
  t0 = jnp.zeros((), dtype=jnp.float32)                          # buffer 't'

  ok = True
  for balanced in (False, True):
    for bc in (128, None):       # 2x2 grid (parallel + online accum) and auto tile
      loss, t_new = curricular_face_loss(
          embeddings, w, label, t0, class_freq,
          m=0.5, s=64.0, balanced=balanced, block_c=bc)
      loss = jax.block_until_ready(loss)
      ref_loss, ref_t = reference_loss(
          embeddings, w, label, t0, class_freq, m=0.5, s=64.0, balanced=balanced)
      ok &= bool(jnp.allclose(loss, ref_loss, rtol=2e-3, atol=2e-3))
      ok &= bool(jnp.allclose(t_new, ref_t, rtol=1e-4, atol=1e-5))

  print("KERNEL_OK" if ok else "MISMATCH")
</pallas_src>

<mosaic_0001>
module attributes {stable_mosaic.version = 11 : i64} {
  func.func @_curricularface_kernel(%arg0: i32, %arg1: i32, %arg2: memref<8x128xbf16, #tpu.memory_space<vmem>>, %arg3: memref<8x1xi32, #tpu.memory_space<vmem>>, %arg4: memref<8x1xf32, #tpu.memory_space<vmem>>, %arg5: memref<8x1xf32, #tpu.memory_space<vmem>>, %arg6: memref<1x1xf32, #tpu.memory_space<smem>>, %arg7: memref<128x128xbf16, #tpu.memory_space<vmem>>, %arg8: memref<1x128xf32, #tpu.memory_space<vmem>>, %arg9: memref<1x8x128xf32, #tpu.memory_space<vmem>>, %arg10: memref<8x1xf32, #tpu.memory_space<vmem>>, %arg11: memref<8x1xf32, #tpu.memory_space<vmem>>, %arg12: memref<8x1xf32, #tpu.memory_space<vmem>>) attributes {dimension_semantics = [#tpu.dimension_semantics<parallel>, #tpu.dimension_semantics<arbitrary>], iteration_bounds = array<i64: 2, 2>, scalar_prefetch = 0 : i64, scratch_operands = 3 : i64, tpu.core_type = #tpu.core_type<tc>, window_params = [{pipeline_mode = #tpu.pipeline_mode<synchronous>, transform_indices = @transform_0, window_bounds = array<i64: 8, 128>}, {pipeline_mode = #tpu.pipeline_mode<synchronous>, transform_indices = @transform_1, window_bounds = array<i64: 8, 1>}, {pipeline_mode = #tpu.pipeline_mode<synchronous>, transform_indices = @transform_2, window_bounds = array<i64: 8, 1>}, {pipeline_mode = #tpu.pipeline_mode<synchronous>, transform_indices = @transform_3, window_bounds = array<i64: 8, 1>}, {transform_indices = @transform_4, window_bounds = array<i64: 1, 1>}, {transform_indices = @transform_5, window_bounds = array<i64: 128, 128>}, {transform_indices = @transform_6, window_bounds = array<i64: 1, 128>}, {transform_indices = @transform_7, window_bounds = array<i64: 1, 8, 128>}]} {
    %c0_i32 = arith.constant 0 : i32
    %0 = arith.cmpi eq, %arg1, %c0_i32 : i32
    %1 = arith.extui %0 : i1 to i32
    %c0_i32_0 = arith.constant 0 : i32
    %2 = arith.cmpi ne, %1, %c0_i32_0 : i32
    scf.if %2 {
      %cst_33 = arith.constant 0xFF800000 : f32
      %60 = vector.broadcast %cst_33 : f32 to vector<8x1xf32>
      %c0_34 = arith.constant 0 : index
      %c0_35 = arith.constant 0 : index
      %61 = vector.load %arg10[%c0_34, %c0_35] : memref<8x1xf32, #tpu.memory_space<vmem>>, vector<8x1xf32>
      tpu.vector_store %arg10[%c0_34, %c0_35], %60 {strides = array<i32>} : memref<8x1xf32, #tpu.memory_space<vmem>>, vector<8x1xf32>,
      %cst_36 = arith.constant 0.000000e+00 : f32
      %62 = vector.broadcast %cst_36 : f32 to vector<8x1xf32>
      %c0_37 = arith.constant 0 : index
      %c0_38 = arith.constant 0 : index
      %63 = vector.load %arg11[%c0_37, %c0_38] : memref<8x1xf32, #tpu.memory_space<vmem>>, vector<8x1xf32>
      tpu.vector_store %arg11[%c0_37, %c0_38], %62 {strides = array<i32>} : memref<8x1xf32, #tpu.memory_space<vmem>>, vector<8x1xf32>,
      %cst_39 = arith.constant 0.000000e+00 : f32
      %64 = vector.broadcast %cst_39 : f32 to vector<8x1xf32>
      %c0_40 = arith.constant 0 : index
      %c0_41 = arith.constant 0 : index
      %65 = vector.load %arg12[%c0_40, %c0_41] : memref<8x1xf32, #tpu.memory_space<vmem>>, vector<8x1xf32>
      tpu.vector_store %arg12[%c0_40, %c0_41], %64 {strides = array<i32>} : memref<8x1xf32, #tpu.memory_space<vmem>>, vector<8x1xf32>,
    } else {
    }
    %c0 = arith.constant 0 : index
    %c0_1 = arith.constant 0 : index
    %3 = vector.load %arg2[%c0, %c0_1] : memref<8x128xbf16, #tpu.memory_space<vmem>>, vector<8x128xbf16>
    %c0_2 = arith.constant 0 : index
    %c0_3 = arith.constant 0 : index
    %4 = vector.load %arg7[%c0_2, %c0_3] : memref<128x128xbf16, #tpu.memory_space<vmem>>, vector<128x128xbf16>
    %cst = arith.constant dense<0.000000e+00> : vector<8x128xf32>
    %5 = tpu.matmul %3, %4, %cst {dimension_numbers = #tpu.dot_dimension_numbers<[1], [0], [0], [1], [0, 0, 1, 1], [], []>} : vector<8x128xbf16>, vector<128x128xbf16>, vector<8x128xf32> -> vector<8x128xf32>
    %c0_4 = arith.constant 0 : index
    %c0_5 = arith.constant 0 : index
    %6 = vector.load %arg8[%c0_4, %c0_5] : memref<1x128xf32, #tpu.memory_space<vmem>>, vector<1x128xf32>
    %7 = vector.broadcast %6 : vector<1x128xf32> to vector<8x128xf32>
    %8 = arith.mulf %5, %7 : vector<8x128xf32>
    %cst_6 = arith.constant -1.000000e+00 : f32
    %cst_7 = arith.constant 1.000000e+00 : f32
    %9 = vector.broadcast %cst_6 : f32 to vector<8x128xf32>
    %10 = arith.maximumf %9, %8 : vector<8x128xf32>
    %11 = vector.broadcast %cst_7 : f32 to vector<8x128xf32>
    %12 = arith.minimumf %11, %10 : vector<8x128xf32>
    %c0_8 = arith.constant 0 : index
    %c0_9 = arith.constant 0 : index
    %13 = memref.load %arg6[%c0_8, %c0_9] : memref<1x1xf32, #tpu.memory_space<smem>>
    %c0_10 = arith.constant 0 : index
    %c0_11 = arith.constant 0 : index
    %14 = vector.load %arg4[%c0_10, %c0_11] : memref<8x1xf32, #tpu.memory_space<vmem>>, vector<8x1xf32>
    %15 = vector.broadcast %14 : vector<8x1xf32> to vector<8x128xf32>
    %16 = arith.cmpf ogt, %12, %15 : vector<8x128xf32>
    %17 = vector.broadcast %13 : f32 to vector<8x128xf32>
    %18 = arith.addf %17, %12 : vector<8x128xf32>
    %19 = arith.mulf %12, %18 : vector<8x128xf32>
    %20 = arith.select %16, %19, %12 : vector<8x128xi1>, vector<8x128xf32>
    %21 = tpu.iota {dimensions = array<i32: 1>} : vector<8x128xi32>
    %c2_i32 = arith.constant 2 : i32
    %22 = arith.muli %arg0, %c2_i32 : i32
    %23 = arith.addi %22, %arg1 : i32
    %c128_i32 = arith.constant 128 : i32
    %24 = arith.muli %23, %c128_i32 : i32
    %c0_12 = arith.constant 0 : index
    %c0_13 = arith.constant 0 : index
    %25 = vector.load %arg3[%c0_12, %c0_13] : memref<8x1xi32, #tpu.memory_space<vmem>>, vector<8x1xi32>
    %26 = vector.broadcast %24 : i32 to vector<8x1xi32>
    %27 = arith.subi %25, %26 : vector<8x1xi32>
    %28 = vector.broadcast %27 : vector<8x1xi32> to vector<8x128xi32>
    %29 = arith.cmpi eq, %21, %28 : vector<8x128xi32>
    %c0_14 = arith.constant 0 : index
    %c0_15 = arith.constant 0 : index
    %30 = vector.load %arg5[%c0_14, %c0_15] : memref<8x1xf32, #tpu.memory_space<vmem>>, vector<8x1xf32>
    %31 = vector.shape_cast %30 : vector<8x1xf32> to vector<8x1xf32>
    %32 = vector.broadcast %31 : vector<8x1xf32> to vector<8x128xf32>
    %33 = arith.select %29, %32, %20 : vector<8x128xi1>, vector<8x128xf32>
    %cst_16 = arith.constant 6.400000e+01 : f32
    %34 = vector.broadcast %cst_16 : f32 to vector<8x128xf32>
    %35 = arith.mulf %33, %34 : vector<8x128xf32>
    %c0_17 = arith.constant 0 : index
    %c0_18 = arith.constant 0 : index
    %36 = vector.load %arg10[%c0_17, %c0_18] : memref<8x1xf32, #tpu.memory_space<vmem>>, vector<8x1xf32>
    %cst_19 = arith.constant dense<0xFF800000> : vector<8xf32>
    %37 = vector.multi_reduction <maximumf>, %35, %cst_19 [1] : vector<8x128xf32> to vector<8xf32>
    %38 = vector.shape_cast %37 : vector<8xf32> to vector<8x1xf32>
    %39 = arith.maximumf %36, %38 : vector<8x1xf32>
    %40 = arith.subf %36, %39 : vector<8x1xf32>
    %41 = math.exp %40 : vector<8x1xf32>
    %c0_20 = arith.constant 0 : index
    %c0_21 = arith.constant 0 : index
    %42 = vector.load %arg11[%c0_20, %c0_21] : memref<8x1xf32, #tpu.memory_space<vmem>>, vector<8x1xf32>
    %43 = arith.mulf %41, %42 : vector<8x1xf32>
    %44 = vector.broadcast %39 : vector<8x1xf32> to vector<8x128xf32>
    %45 = arith.subf %35, %44 : vector<8x128xf32>
    %46 = math.exp %45 : vector<8x128xf32>
    %cst_22 = arith.constant dense<0.000000e+00> : vector<8xf32>
    %47 = vector.multi_reduction <add>, %46, %cst_22 [1] : vector<8x128xf32> to vector<8xf32>
    %48 = vector.shape_cast %47 : vector<8xf32> to vector<8x1xf32>
    %49 = arith.addf %43, %48 : vector<8x1xf32>
    %c0_23 = arith.constant 0 : index
    %c0_24 = arith.constant 0 : index
    %50 = vector.load %arg11[%c0_23, %c0_24] : memref<8x1xf32, #tpu.memory_space<vmem>>, vector<8x1xf32>
    tpu.vector_store %arg11[%c0_23, %c0_24], %49 {strides = array<i32>} : memref<8x1xf32, #tpu.memory_space<vmem>>, vector<8x1xf32>,
    %c0_25 = arith.constant 0 : index
    %c0_26 = arith.constant 0 : index
    %51 = vector.load %arg12[%c0_25, %c0_26] : memref<8x1xf32, #tpu.memory_space<vmem>>, vector<8x1xf32>
    %cst_27 = arith.constant dense<0.000000e+00> : vector<8xf32>
    %52 = vector.multi_reduction <add>, %35, %cst_27 [1] : vector<8x128xf32> to vector<8xf32>
    %53 = vector.shape_cast %52 : vector<8xf32> to vector<8x1xf32>
    %54 = arith.addf %51, %53 : vector<8x1xf32>
    %c0_28 = arith.constant 0 : index
    %c0_29 = arith.constant 0 : index
    %55 = vector.load %arg12[%c0_28, %c0_29] : memref<8x1xf32, #tpu.memory_space<vmem>>, vector<8x1xf32>
    tpu.vector_store %arg12[%c0_28, %c0_29], %54 {strides = array<i32>} : memref<8x1xf32, #tpu.memory_space<vmem>>, vector<8x1xf32>,
    %c0_30 = arith.constant 0 : index
    %c0_31 = arith.constant 0 : index
    %56 = vector.load %arg10[%c0_30, %c0_31] : memref<8x1xf32, #tpu.memory_space<vmem>>, vector<8x1xf32>
    tpu.vector_store %arg10[%c0_30, %c0_31], %39 {strides = array<i32>} : memref<8x1xf32, #tpu.memory_space<vmem>>, vector<8x1xf32>,
    %c1_i32 = arith.constant 1 : i32
    %57 = arith.cmpi eq, %arg1, %c1_i32 : i32
    %58 = arith.extui %57 : i1 to i32
    %c0_i32_32 = arith.constant 0 : i32
    %59 = arith.cmpi ne, %58, %c0_i32_32 : i32
    scf.if %59 {
      %60 = tpu.iota {dimensions = array<i32: 1>} : vector<8x128xi32>
      %c0_i32_33 = arith.constant 0 : i32
      %61 = vector.broadcast %c0_i32_33 : i32 to vector<8x128xi32>
      %62 = arith.cmpi eq, %60, %61 : vector<8x128xi32>
      %c0_34 = arith.constant 0 : index
      %c0_35 = arith.constant 0 : index
      %63 = vector.load %arg10[%c0_34, %c0_35] : memref<8x1xf32, #tpu.memory_space<vmem>>, vector<8x1xf32>
      %cst_36 = arith.constant 0.000000e+00 : f32
      %64 = vector.shape_cast %63 : vector<8x1xf32> to vector<8x1xf32>
      %65 = vector.broadcast %64 : vector<8x1xf32> to vector<8x128xf32>
      %66 = vector.broadcast %cst_36 : f32 to vector<8x128xf32>
      %67 = arith.select %62, %65, %66 : vector<8x128xi1>, vector<8x128xf32>
      %c1_i32_37 = arith.constant 1 : i32
      %68 = vector.broadcast %c1_i32_37 : i32 to vector<8x128xi32>
      %69 = arith.cmpi eq, %60, %68 : vector<8x128xi32>
      %c0_38 = arith.constant 0 : index
      %c0_39 = arith.constant 0 : index
      %70 = vector.load %arg11[%c0_38, %c0_39] : memref<8x1xf32, #tpu.memory_space<vmem>>, vector<8x1xf32>
      %cst_40 = arith.constant 0.000000e+00 : f32
      %71 = vector.shape_cast %70 : vector<8x1xf32> to vector<8x1xf32>
      %72 = vector.broadcast %71 : vector<8x1xf32> to vector<8x128xf32>
      %73 = vector.broadcast %cst_40 : f32 to vector<8x128xf32>
      %74 = arith.select %69, %72, %73 : vector<8x128xi1>, vector<8x128xf32>
      %75 = arith.addf %67, %74 : vector<8x128xf32>
      %c2_i32_41 = arith.constant 2 : i32
      %76 = vector.broadcast %c2_i32_41 : i32 to vector<8x128xi32>
      %77 = arith.cmpi eq, %60, %76 : vector<8x128xi32>
      %c0_42 = arith.constant 0 : index
      %c0_43 = arith.constant 0 : index
      %78 = vector.load %arg12[%c0_42, %c0_43] : memref<8x1xf32, #tpu.memory_space<vmem>>, vector<8x1xf32>
      %cst_44 = arith.constant 0.000000e+00 : f32
      %79 = vector.shape_cast %78 : vector<8x1xf32> to vector<8x1xf32>
      %80 = vector.broadcast %79 : vector<8x1xf32> to vector<8x128xf32>
      %81 = vector.broadcast %cst_44 : f32 to vector<8x128xf32>
      %82 = arith.select %77, %80, %81 : vector<8x128xi1>, vector<8x128xf32>
      %83 = arith.addf %75, %82 : vector<8x128xf32>
      %c0_45 = arith.constant 0 : index
      %c0_46 = arith.constant 0 : index
      %c0_47 = arith.constant 0 : index
      %84 = vector.load %arg9[%c0_45, %c0_46, %c0_47] : memref<1x8x128xf32, #tpu.memory_space<vmem>>, vector<1x8x128xf32>
      %85 = vector.shape_cast %84 : vector<1x8x128xf32> to vector<8x128xf32>
      %86 = vector.shape_cast %83 : vector<8x128xf32> to vector<1x8x128xf32>
      tpu.vector_store %arg9[%c0_45, %c0_46, %c0_47], %86 {strides = array<i32>} : memref<1x8x128xf32, #tpu.memory_space<vmem>>, vector<1x8x128xf32>,
    } else {
    }
    return
  }
  func.func @transform_0(%arg0: i32, %arg1: i32) -> (i32, i32) {
    %c0_i32 = arith.constant 0 : i32
    %c0_i32_0 = arith.constant 0 : i32
    %c0_i32_1 = arith.constant 0 : i32
    return %c0_i32, %c0_i32_0 : i32, i32
  }
  func.func @transform_1(%arg0: i32, %arg1: i32) -> (i32, i32) {
    %c0_i32 = arith.constant 0 : i32
    %c0_i32_0 = arith.constant 0 : i32
    %c0_i32_1 = arith.constant 0 : i32
    return %c0_i32, %c0_i32_0 : i32, i32
  }
  func.func @transform_2(%arg0: i32, %arg1: i32) -> (i32, i32) {
    %c0_i32 = arith.constant 0 : i32
    %c0_i32_0 = arith.constant 0 : i32
    %c0_i32_1 = arith.constant 0 : i32
    return %c0_i32, %c0_i32_0 : i32, i32
  }
  func.func @transform_3(%arg0: i32, %arg1: i32) -> (i32, i32) {
    %c0_i32 = arith.constant 0 : i32
    %c0_i32_0 = arith.constant 0 : i32
    %c0_i32_1 = arith.constant 0 : i32
    return %c0_i32, %c0_i32_0 : i32, i32
  }
  func.func @transform_4(%arg0: i32, %arg1: i32) -> (i32, i32) {
    %c0_i32 = arith.constant 0 : i32
    %c0_i32_0 = arith.constant 0 : i32
    %c0_i32_1 = arith.constant 0 : i32
    return %c0_i32, %c0_i32_0 : i32, i32
  }
  func.func @transform_5(%arg0: i32, %arg1: i32) -> (i32, i32) {
    %c2_i32 = arith.constant 2 : i32
    %0 = arith.muli %arg0, %c2_i32 : i32
    %1 = arith.addi %0, %arg1 : i32
    %c0_i32 = arith.constant 0 : i32
    %c0_i32_0 = arith.constant 0 : i32
    return %c0_i32, %1 : i32, i32
  }
  func.func @transform_6(%arg0: i32, %arg1: i32) -> (i32, i32) {
    %c2_i32 = arith.constant 2 : i32
    %0 = arith.muli %arg0, %c2_i32 : i32
    %1 = arith.addi %0, %arg1 : i32
    %c0_i32 = arith.constant 0 : i32
    %c0_i32_0 = arith.constant 0 : i32
    return %c0_i32, %1 : i32, i32
  }
  func.func @transform_7(%arg0: i32, %arg1: i32) -> (i32, i32, i32) {
    %c0_i32 = arith.constant 0 : i32
    %c0_i32_0 = arith.constant 0 : i32
    %c0_i32_1 = arith.constant 0 : i32
    return %arg0, %c0_i32, %c0_i32_0 : i32, i32, i32
  }
}

</mosaic_0001>

<llo_original>
// kernel: curricular_face_loss.1
$region0: #{curricular_face_loss.1}
  #allocation0 [shape = 'u32[]', space=smem, size = 0x4, offset = 0x4, fixed_abs, tag = 'smem constant byte address 0x4 - core index']
  #allocation1 [shape = 'u32[144,128]{1,0:T(1,128)}', space=vmem, size = 0x12000, scoped, tag = 'internal scratch']
  #allocation2 [shape = 'f32[8,1]{1,0:T(8,128)}', space=vmem, size = 0x1000, scoped, tag = 'scratch operand']
  #allocation3 [shape = 'f32[8,1]{1,0:T(8,128)}', space=vmem, size = 0x1000, scoped, tag = 'scratch operand']
  #allocation4 [shape = 'f32[8,1]{1,0:T(8,128)}', space=vmem, size = 0x1000, scoped, tag = 'scratch operand']
  #allocation5 [shape = 'f32[1,1]{1,0:T(1,128)S(6)}', space=smem, size = 0x200, scoped, tag = 'scoped memory for curricular_face_loss.1']
  %s0 = inlined_call_operand.vmem [shape: bf16[8,128], index: 0, kind: input, shape index: {}]
  %s1 = inlined_call_operand.vmem [shape: s32[8,1], index: 1, kind: input, shape index: {}]
  %s2 = inlined_call_operand.vmem [shape: f32[8,1], index: 2, kind: input, shape index: {}]
  %s3 = inlined_call_operand.vmem [shape: f32[8,1], index: 3, kind: input, shape index: {}]
  %s4 = inlined_call_operand.<no memory space> [shape: f32[1,1], index: 4, kind: input, shape index: {}]
  %s5 = inlined_call_operand.vmem [shape: bf16[128,512], index: 5, kind: input, shape index: {}]
  %s6 = inlined_call_operand.vmem [shape: f32[1,512], index: 6, kind: input, shape index: {}]
  %s7 = inlined_call_operand.vmem [shape: f32[2,8,128], index: 7, kind: output, shape index: {}]
  %s8 = sld [smem:[#allocation0]]
  $region110: #{curricular_face_loss.1} parent=0
    _
  %s10 = ssub.s32 1, %s8
  %s11 = scalar_select 0, %s10, %s8
  %12 = sst [smem:[#allocation5]] %s4
  $region1: #{curricular_face_loss.1} parent=0
    #allocation6 [shape = 'u8[65536]{0}', space=vmem, size = 0x10000, scoped, tag = 'input window, operand 5']
    loop: start=0, step=1, limit=6
    $region2: #{curricular_face_loss.1} parent=1 // loop_pre_header
      _
    $region3: #{curricular_face_loss.1} parent=1 // loop_header
      %s14 = sphi 0, %s18
      %p15 = scmp.ge.s32.totalorder %s14, 6
      %s21 = sphi 0, %s33
      %s22 = sphi 0, %s29
      %s23 = sphi 0, %s21
      %s24 = sphi 0, %s22
      %s25 = sphi 0, %s23
      %s26 = sphi 0, %s24
      %s34 = sphi 0, %s34
      %s36 = sphi 0, %s34
      %s37 = sphi 0, %s36
      %s51 = sphi 0, %s37
      %s55 = sphi 0, %s55
      %s57 = sphi 0, %s55
      %s58 = sphi 0, %s57
      %s72 = sphi 0, %s58
      %s76 = sphi 0, %s76
      %s78 = sphi 0, %s76
      %s79 = sphi 0, %s78
      %s93 = sphi 0, %s79
      %s97 = sphi 0, %s97
      %s99 = sphi 0, %s97
      %s100 = sphi 0, %s99
      %s114 = sphi 0, %s100
      %s118 = sphi 0, %s118
      %s120 = sphi 0, %s118
      %s121 = sphi 0, %s120
      %s135 = sphi 0, %s121
      %s145 = sphi 0, %s147
      %s148 = sphi 0, %s145
      %s149 = sphi 0, %s148
      %s165 = sphi 0, %s149
      %s175 = sphi 0, %s177
      %s178 = sphi 0, %s175
      %s179 = sphi 0, %s178
      %s195 = sphi 0, %s179
      %s201 = sphi 0, %s203
      %s204 = sphi 0, %s201
      %s205 = sphi 0, %s204
      %s221 = sphi 0, %s205
    $region4: #{curricular_face_loss.1} parent=1 // loop_header_branch
      %17 = sbr.rel (%p15) target = $region8
    $region5: #{curricular_face_loss.1} parent=1 // loop_body
      %s19 = ssub.s32 %s14, 1
      %s20 = ssub.s32 %s14, 2
      %s27 = sadd.s32 1, %s22
      %p28 = scmp.ge.s32.totalorder %s27, 2
      %s29 = scalar_select %p28, 0, %s27
      %s30 = sadd.s32 1, %s21
      %s31 = scalar_select %p28, %s30, %s21
      %p32 = scmp.ge.s32.totalorder %s31, 2
      %s33 = scalar_select %p32, 0, %s31
      %s35 = sadd.s32 %s34, 1
      %p38 = scmp.eq.s32.totalorder %s14, 3
      %p39 = scmp.ne.s32.totalorder %s34, %s36
      %p40 = scmp.eq.s32.totalorder %s14, 0
      %p41 = por %p39, %p40
      %p42 = scmp.ne.s32.totalorder %s34, %s36
      %p43 = scmp.eq.s32.totalorder %s19, 3
      %p44 = por %p42, %p43
      %p45 = scmp.ne.s32.totalorder %s36, %s37
      %p46 = scmp.eq.s32.totalorder %s19, 0
      %p47 = por %p45, %p46
      %p48 = scmp.ne.s32.totalorder %s36, %s37
      %p49 = scmp.eq.s32.totalorder %s20, 3
      %p50 = por %p48, %p49
      %p52 = scmp.ne.s32.totalorder %s37, %s51
      %p53 = scmp.eq.s32.totalorder %s20, 0
      %p54 = por %p52, %p53
      %s56 = sadd.s32 %s55, 1
      %p59 = scmp.eq.s32.totalorder %s14, 3
      %p60 = scmp.ne.s32.totalorder %s55, %s57
      %p61 = scmp.eq.s32.totalorder %s14, 0
      %p62 = por %p60, %p61
      %p63 = scmp.ne.s32.totalorder %s55, %s57
      %p64 = scmp.eq.s32.totalorder %s19, 3
      %p65 = por %p63, %p64
      %p66 = scmp.ne.s32.totalorder %s57, %s58
      %p67 = scmp.eq.s32.totalorder %s19, 0
      %p68 = por %p66, %p67
      %p69 = scmp.ne.s32.totalorder %s57, %s58
      %p70 = scmp.eq.s32.totalorder %s20, 3
      %p71 = por %p69, %p70
      %p73 = scmp.ne.s32.totalorder %s58, %s72
      %p74 = scmp.eq.s32.totalorder %s20, 0
      %p75 = por %p73, %p74
      %s77 = sadd.s32 %s76, 1
      %p80 = scmp.eq.s32.totalorder %s14, 3
      %p81 = scmp.ne.s32.totalorder %s76, %s78
      %p82 = scmp.eq.s32.totalorder %s14, 0
      %p83 = por %p81, %p82
      %p84 = scmp.ne.s32.totalorder %s76, %s78
      %p85 = scmp.eq.s32.totalorder %s19, 3
      %p86 = por %p84, %p85
      %p87 = scmp.ne.s32.totalorder %s78, %s79
      %p88 = scmp.eq.s32.totalorder %s19, 0
      %p89 = por %p87, %p88
      %p90 = scmp.ne.s32.totalorder %s78, %s79
      %p91 = scmp.eq.s32.totalorder %s20, 3
      %p92 = por %p90, %p91
      %p94 = scmp.ne.s32.totalorder %s79, %s93
      %p95 = scmp.eq.s32.totalorder %s20, 0
      %p96 = por %p94, %p95
      %s98 = sadd.s32 %s97, 1
      %p101 = scmp.eq.s32.totalorder %s14, 3
      %p102 = scmp.ne.s32.totalorder %s97, %s99
      %p103 = scmp.eq.s32.totalorder %s14, 0
      %p104 = por %p102, %p103
      %p105 = scmp.ne.s32.totalorder %s97, %s99
      %p106 = scmp.eq.s32.totalorder %s19, 3
      %p107 = por %p105, %p106
      %p108 = scmp.ne.s32.totalorder %s99, %s100
      %p109 = scmp.eq.s32.totalorder %s19, 0
      %p110 = por %p108, %p109
      %p111 = scmp.ne.s32.totalorder %s99, %s100
      %p112 = scmp.eq.s32.totalorder %s20, 3
      %p113 = por %p111, %p112
      %p115 = scmp.ne.s32.totalorder %s100, %s114
      %p116 = scmp.eq.s32.totalorder %s20, 0
      %p117 = por %p115, %p116
      %s119 = sadd.s32 %s118, 1
      %p122 = scmp.eq.s32.totalorder %s14, 3
      %p123 = scmp.ne.s32.totalorder %s118, %s120
      %p124 = scmp.eq.s32.totalorder %s14, 0
      %p125 = por %p123, %p124
      %p126 = scmp.ne.s32.totalorder %s118, %s120
      %p127 = scmp.eq.s32.totalorder %s19, 3
      %p128 = por %p126, %p127
      %p129 = scmp.ne.s32.totalorder %s120, %s121
      %p130 = scmp.eq.s32.totalorder %s19, 0
      %p131 = por %p129, %p130
      %p132 = scmp.ne.s32.totalorder %s120, %s121
      %p133 = scmp.eq.s32.totalorder %s20, 3
      %p134 = por %p132, %p133
      %p136 = scmp.ne.s32.totalorder %s121, %s135
      %p137 = scmp.eq.s32.totalorder %s20, 0
      %p138 = por %p136, %p137
      %s139 = smul.u32 %s21, 2
      %s140 = sadd.s32 %s139, %s22
      %s141 = smul.u32 %s33, 2
      %s142 = sadd.s32 %s141, %s29
      %s143 = ssub.s32 %s140, %s142
      %p144 = scmp.eq.s32.totalorder %s143, 0
      %s146 = sadd.s32 %s145, 1
      %s147 = scalar_select %p144, %s145, %s146
      %p150 = pneg %p144
      %p151 = scmp.eq.s32.totalorder %s14, 3
      %p152 = por %p150, %p151
      %p153 = scmp.ne.s32.totalorder %s145, %s148
      %p154 = scmp.eq.s32.totalorder %s14, 0
      %p155 = por %p153, %p154
      %p156 = scmp.ne.s32.totalorder %s145, %s148
      %p157 = scmp.eq.s32.totalorder %s19, 3
      %p158 = por %p156, %p157
      %p159 = scmp.ne.s32.totalorder %s148, %s149
      %p160 = scmp.eq.s32.totalorder %s19, 0
      %p161 = por %p159, %p160
      %p162 = scmp.ne.s32.totalorder %s148, %s149
      %p163 = scmp.eq.s32.totalorder %s20, 3
      %p164 = por %p162, %p163
      %p166 = scmp.ne.s32.totalorder %s149, %s165
      %p167 = scmp.eq.s32.totalorder %s20, 0
      %p168 = por %p166, %p167
      %s169 = smul.u32 %s21, 2
      %s170 = sadd.s32 %s169, %s22
      %s171 = smul.u32 %s33, 2
      %s172 = sadd.s32 %s171, %s29
      %s173 = ssub.s32 %s170, %s172
      %p174 = scmp.eq.s32.totalorder %s173, 0
      %s176 = sadd.s32 %s175, 1
      %s177 = scalar_select %p174, %s175, %s176
      %p180 = pneg %p174
      %p181 = scmp.eq.s32.totalorder %s14, 3
      %p182 = por %p180, %p181
      %p183 = scmp.ne.s32.totalorder %s175, %s178
      %p184 = scmp.eq.s32.totalorder %s14, 0
      %p185 = por %p183, %p184
      %p186 = scmp.ne.s32.totalorder %s175, %s178
      %p187 = scmp.eq.s32.totalorder %s19, 3
      %p188 = por %p186, %p187
      %p189 = scmp.ne.s32.totalorder %s178, %s179
      %p190 = scmp.eq.s32.totalorder %s19, 0
      %p191 = por %p189, %p190
      %p192 = scmp.ne.s32.totalorder %s178, %s179
      %p193 = scmp.eq.s32.totalorder %s20, 3
      %p194 = por %p192, %p193
      %p196 = scmp.ne.s32.totalorder %s179, %s195
      %p197 = scmp.eq.s32.totalorder %s20, 0
      %p198 = por %p196, %p197
      %s199 = ssub.s32 %s21, %s33
      %p200 = scmp.eq.s32.totalorder %s199, 0
      %s202 = sadd.s32 %s201, 1
      %s203 = scalar_select %p200, %s201, %s202
      %p206 = pneg %p200
      %p207 = scmp.eq.s32.totalorder %s14, 3
      %p208 = por %p206, %p207
      %p209 = scmp.ne.s32.totalorder %s201, %s204
      %p210 = scmp.eq.s32.totalorder %s14, 0
      %p211 = por %p209, %p210
      %p212 = scmp.ne.s32.totalorder %s201, %s204
      %p213 = scmp.eq.s32.totalorder %s19, 3
      %p214 = por %p212, %p213
      %p215 = scmp.ne.s32.totalorder %s204, %s205
      %p216 = scmp.eq.s32.totalorder %s19, 0
      %p217 = por %p215, %p216
      %p218 = scmp.ne.s32.totalorder %s204, %s205
      %p219 = scmp.eq.s32.totalorder %s20, 3
      %p220 = por %p218, %p219
      %p222 = scmp.ne.s32.totalorder %s205, %s221
      %p223 = scmp.eq.s32.totalorder %s20, 0
      %p224 = por %p222, %p223
      %p225 = scmp.le.s32.totalorder 1, %s14
      %p226 = scmp.lt.s32.totalorder %s14, 5
      %p227 = pnand %p225, %p226
      %p228 = pneg %p227
      // Predicated region
      $region9: #{curricular_face_loss.1} parent=5 // pred_check
        _
      $region10: #{curricular_face_loss.1} parent=5 // pred_check_branch
        %230 = sbr.rel (%p227) target = $region12
      $region11: #{curricular_face_loss.1} parent=5 // pred_region
        %s231 = ssub.s32 %s14, 1
        // Predicated region
        $region13: #{curricular_face_loss.1} parent=11 // pred_check
          %p232 = pneg %p47
        $region14: #{curricular_face_loss.1} parent=11 // pred_check_branch
          %234 = sbr.rel (%p232) target = $region16
        $region15: #{curricular_face_loss.1} parent=11 // pred_region
          _
        $region16: #{curricular_face_loss.1} parent=11 // pred_fallthru
          _
        // Predicated region
        $region17: #{curricular_face_loss.1} parent=11 // pred_check
          %p235 = pneg %p68
        $region18: #{curricular_face_loss.1} parent=11 // pred_check_branch
          %237 = sbr.rel (%p235) target = $region20
        $region19: #{curricular_face_loss.1} parent=11 // pred_region
          _
        $region20: #{curricular_face_loss.1} parent=11 // pred_fallthru
          _
        // Predicated region
        $region21: #{curricular_face_loss.1} parent=11 // pred_check
          %p238 = pneg %p89
        $region22: #{curricular_face_loss.1} parent=11 // pred_check_branch
          %240 = sbr.rel (%p238) target = $region24
        $region23: #{curricular_face_loss.1} parent=11 // pred_region
          _
        $region24: #{curricular_face_loss.1} parent=11 // pred_fallthru
          _
        // Predicated region
        $region25: #{curricular_face_loss.1} parent=11 // pred_check
          %p241 = pneg %p110
        $region26: #{curricular_face_loss.1} parent=11 // pred_check_branch
          %243 = sbr.rel (%p241) target = $region28
        $region27: #{curricular_face_loss.1} parent=11 // pred_region
          _
        $region28: #{curricular_face_loss.1} parent=11 // pred_fallthru
          _
        // Predicated region
        $region29: #{curricular_face_loss.1} parent=11 // pred_check
          %p244 = pneg %p131
        $region30: #{curricular_face_loss.1} parent=11 // pred_check_branch
          %246 = sbr.rel (%p244) target = $region32
        $region31: #{curricular_face_loss.1} parent=11 // pred_region
          _
        $region32: #{curricular_face_loss.1} parent=11 // pred_fallthru
          _
      $region12: #{curricular_face_loss.1} parent=5 // pred_fallthru
        _
      %p247 = scmp.lt.s32.totalorder %s14, 4
      // Predicated region
      $region33: #{curricular_face_loss.1} parent=5 // pred_check
        %p248 = pneg %p247
      $region34: #{curricular_face_loss.1} parent=5 // pred_check_branch
        %250 = sbr.rel (%p248) target = $region36
      $region35: #{curricular_face_loss.1} parent=5 // pred_region
        // Predicated region
        $region37: #{curricular_face_loss.1} parent=35 // pred_check
          %p251 = pneg %p155
        $region38: #{curricular_face_loss.1} parent=35 // pred_check_branch
          %253 = sbr.rel (%p251) target = $region40
        $region39: #{curricular_face_loss.1} parent=35 // pred_region
          %s254 = sand.u32 %s145, 1
          %s255 = sand.u32 %s145, 1
          %s256 = smul.addr %s255, 64
          %s257 = scalar_lea.vmem [#allocation6], %s256
          %s258 = smul.u32 %s21, 2
          %s259 = sadd.s32 %s258, %s22
          %s260 = smul.addr %s259, 4
          %s261 = scalar_lea.vmem %s5, %s260
          // Predicated region
          $region41: #{curricular_face_loss.1} parent=39 // pred_check
            _
          $region42: #{curricular_face_loss.1} parent=39 // pred_check_branch
            %263 = sbr.rel (0) target = $region44
          $region43: #{curricular_face_loss.1} parent=39 // pred_region
            // Predicated region
            $region45: #{curricular_face_loss.1} parent=43 // pred_check
              _
            $region46: #{curricular_face_loss.1} parent=43 // pred_check_branch
              %265 = sbr.rel target = $region48
            $region47: #{curricular_face_loss.1} parent=43 // pred_region
              // Predicated region
              $region60: #{curricular_face_loss.1} parent=47 // pred_check
                _
              $region61: #{curricular_face_loss.1} parent=47 // pred_check_branch
                %311 = sbr.rel (0) target = $region63
              $region62: #{curricular_face_loss.1} parent=47 // pred_region
                loop: start=0, step=1, limit=1
                $region64: #{curricular_face_loss.1} parent=62 // loop_pre_header
                  _
                $region65: #{curricular_face_loss.1} parent=62 // loop_header
                  %s313 = sphi 0, %s317
                  %p314 = scmp.ge.s32.totalorder %s313, 1
                  %s318 = sphi %s261, %s261
                  %s319 = sphi %s257, %s257
                $region66: #{curricular_face_loss.1} parent=62 // loop_header_branch
                  %316 = sbr.rel (%p314) target = $region70
                $region67: #{curricular_face_loss.1} parent=62 // loop_body
                  _
                $region68: #{curricular_face_loss.1} parent=62 // loop_footer
                  %s317 = sadd.s32 1, %s313
                $region69: #{curricular_face_loss.1} parent=62 // loop_footer_branch
                  %312 = sbr.rel target = $region65
                $region70: #{curricular_face_loss.1} parent=62 // loop_exit
                  _
                %s321 = ssub.s32 16, 1
                loop: start=0, step=1, limit=1
                $region71: #{curricular_face_loss.1} parent=62 // loop_pre_header
                  _
                $region72: #{curricular_face_loss.1} parent=62 // loop_header
                  %s323 = sphi 0, %s327
                  %p324 = scmp.ge.s32.totalorder %s323, 1
                  %s328 = sphi %s261, %s261
                  %s329 = sphi %s257, %s257
                $region73: #{curricular_face_loss.1} parent=62 // loop_header_branch
                  %326 = sbr.rel (%p324) target = $region77
                $region74: #{curricular_face_loss.1} parent=62 // loop_body
                  %v330 = vld [vmem:[%s328] sm:%s321]
                  %331 = vst [vmem:[%s329] sm:%s321] %v330
                  %v332 = vld [vmem:[%s328 + $0x10] sm:%s321]
                  %333 = vst [vmem:[%s329 + $0x4] sm:%s321] %v332
                  %v334 = vld [vmem:[%s328 + $0x20] sm:%s321]
                  %335 = vst [vmem:[%s329 + $0x8] sm:%s321] %v334
                  %v336 = vld [vmem:[%s328 + $0x30] sm:%s321]
                  %337 = vst [vmem:[%s329 + $0xc] sm:%s321] %v336
                  %v338 = vld [vmem:[%s328 + $0x40] sm:%s321]
                  %339 = vst [vmem:[%s329 + $0x10] sm:%s321] %v338
                  %v340 = vld [vmem:[%s328 + $0x50] sm:%s321]
                  %341 = vst [vmem:[%s329 + $0x14] sm:%s321] %v340
                  %v342 = vld [vmem:[%s328 + $0x60] sm:%s321]
                  %343 = vst [vmem:[%s329 + $0x18] sm:%s321] %v342
                  %v344 = vld [vmem:[%s328 + $0x70] sm:%s321]
                  %345 = vst [vmem:[%s329 + $0x1c] sm:%s321] %v344
                  %v346 = vld [vmem:[%s328 + $0x80] sm:%s321]
                  %347 = vst [vmem:[%s329 + $0x20] sm:%s321] %v346
                  %v348 = vld [vmem:[%s328 + $0x90] sm:%s321]
                  %349 = vst [vmem:[%s329 + $0x24] sm:%s321] %v348
                  %v350 = vld [vmem:[%s328 + $0xa0] sm:%s321]
                  %351 = vst [vmem:[%s329 + $0x28] sm:%s321] %v350
                  %v352 = vld [vmem:[%s328 + $0xb0] sm:%s321]
                  %353 = vst [vmem:[%s329 + $0x2c] sm:%s321] %v352
                  %v354 = vld [vmem:[%s328 + $0xc0] sm:%s321]
                  %355 = vst [vmem:[%s329 + $0x30] sm:%s321] %v354
                  %v356 = vld [vmem:[%s328 + $0xd0] sm:%s321]
                  %357 = vst [vmem:[%s329 + $0x34] sm:%s321] %v356
                  %v358 = vld [vmem:[%s328 + $0xe0] sm:%s321]
                  %359 = vst [vmem:[%s329 + $0x38] sm:%s321] %v358
                  %v360 = vld [vmem:[%s328 + $0xf0] sm:%s321]
                  %361 = vst [vmem:[%s329 + $0x3c] sm:%s321] %v360
                $region75: #{curricular_face_loss.1} parent=62 // loop_footer
                  %s327 = sadd.s32 1, %s323
                $region76: #{curricular_face_loss.1} parent=62 // loop_footer_branch
                  %322 = sbr.rel target = $region72
                $region77: #{curricular_face_loss.1} parent=62 // loop_exit
                  _
              $region63: #{curricular_face_loss.1} parent=47 // pred_fallthru
                _
            $region48: #{curricular_face_loss.1} parent=43 // pred_fallthru
              _
            // Predicated region
            $region49: #{curricular_face_loss.1} parent=43 // pred_check
              _
            $region50: #{curricular_face_loss.1} parent=43 // pred_check_branch
              %267 = sbr.rel (0) target = $region52
            $region51: #{curricular_face_loss.1} parent=43 // pred_region
              %s269 = ssub.s32 16, 1
              loop: start=0, step=1, limit=1
              $region53: #{curricular_face_loss.1} parent=51 // loop_pre_header
                _
              $region54: #{curricular_face_loss.1} parent=51 // loop_header
                %s271 = sphi 0, %s275
                %p272 = scmp.ge.s32.totalorder %s271, 1
                %s276 = sphi %s261, %s261
                %s277 = sphi %s257, %s257
              $region55: #{curricular_face_loss.1} parent=51 // loop_header_branch
                %274 = sbr.rel (%p272) target = $region59
              $region56: #{curricular_face_loss.1} parent=51 // loop_body
                %v278 = vld [vmem:[%s276] sm:%s269]
                %279 = vst [vmem:[%s277] sm:%s269] %v278
                %v280 = vld [vmem:[%s276 + $0x10] sm:%s269]
                %281 = vst [vmem:[%s277 + $0x4] sm:%s269] %v280
                %v282 = vld [vmem:[%s276 + $0x20] sm:%s269]
                %283 = vst [vmem:[%s277 + $0x8] sm:%s269] %v282
                %v284 = vld [vmem:[%s276 + $0x30] sm:%s269]
                %285 = vst [vmem:[%s277 + $0xc] sm:%s269] %v284
                %v286 = vld [vmem:[%s276 + $0x40] sm:%s269]
                %287 = vst [vmem:[%s277 + $0x10] sm:%s269] %v286
                %v288 = vld [vmem:[%s276 + $0x50] sm:%s269]
                %289 = vst [vmem:[%s277 + $0x14] sm:%s269] %v288
                %v290 = vld [vmem:[%s276 + $0x60] sm:%s269]
                %291 = vst [vmem:[%s277 + $0x18] sm:%s269] %v290
                %v292 = vld [vmem:[%s276 + $0x70] sm:%s269]
                %293 = vst [vmem:[%s277 + $0x1c] sm:%s269] %v292
                %v294 = vld [vmem:[%s276 + $0x80] sm:%s269]
                %295 = vst [vmem:[%s277 + $0x20] sm:%s269] %v294
                %v296 = vld [vmem:[%s276 + $0x90] sm:%s269]
                %297 = vst [vmem:[%s277 + $0x24] sm:%s269] %v296
                %v298 = vld [vmem:[%s276 + $0xa0] sm:%s269]
                %299 = vst [vmem:[%s277 + $0x28] sm:%s269] %v298
                %v300 = vld [vmem:[%s276 + $0xb0] sm:%s269]
                %301 = vst [vmem:[%s277 + $0x2c] sm:%s269] %v300
                %v302 = vld [vmem:[%s276 + $0xc0] sm:%s269]
                %303 = vst [vmem:[%s277 + $0x30] sm:%s269] %v302
                %v304 = vld [vmem:[%s276 + $0xd0] sm:%s269]
                %305 = vst [vmem:[%s277 + $0x34] sm:%s269] %v304
                %v306 = vld [vmem:[%s276 + $0xe0] sm:%s269]
                %307 = vst [vmem:[%s277 + $0x38] sm:%s269] %v306
                %v308 = vld [vmem:[%s276 + $0xf0] sm:%s269]
                %309 = vst [vmem:[%s277 + $0x3c] sm:%s269] %v308
              $region57: #{curricular_face_loss.1} parent=51 // loop_footer
                %s275 = sadd.s32 1, %s271
              $region58: #{curricular_face_loss.1} parent=51 // loop_footer_branch
                %270 = sbr.rel target = $region54
              $region59: #{curricular_face_loss.1} parent=51 // loop_exit
                _
            $region52: #{curricular_face_loss.1} parent=43 // pred_fallthru
              _
          $region44: #{curricular_face_loss.1} parent=39 // pred_fallthru
            _
          %362 = vnop
        $region40: #{curricular_face_loss.1} parent=35 // pred_fallthru
          _
        // Predicated region
        $region78: #{curricular_face_loss.1} parent=35 // pred_check
          %p363 = pneg %p185
        $region79: #{curricular_face_loss.1} parent=35 // pred_check_branch
          %365 = sbr.rel (%p363) target = $region81
        $region80: #{curricular_face_loss.1} parent=35 // pred_region
          %s366 = smul.u32 %s21, 2
          %s367 = sadd.s32 %s366, %s22
          %p368 = scmp.lt.s32.totalorder %s367, 3
          %s369 = scalar_select %p368, %s367, 3
          %s370 = scalar_lea.vmem %s6, %s369
          %s371 = smul.u32 %s21, 2
          %s372 = sadd.s32 %s371, %s22
        $region81: #{curricular_face_loss.1} parent=35 // pred_fallthru
          _
      $region36: #{curricular_face_loss.1} parent=5 // pred_fallthru
        _
      %p373 = scmp.le.s32.totalorder 1, %s14
      %p374 = scmp.lt.s32.totalorder %s14, 5
      %p375 = pnand %p373, %p374
      %p376 = pneg %p375
      // Predicated region
      $region82: #{curricular_face_loss.1} parent=5 // pred_check
        _
      $region83: #{curricular_face_loss.1} parent=5 // pred_check_branch
        %378 = sbr.rel (%p375) target = $region85
      $region84: #{curricular_face_loss.1} parent=5 // pred_region
        %s379 = ssub.s32 %s14, 1
        %s380 = sand.u32 %s148, 1
        %s381 = sand.u32 %s148, 1
        %s382 = smul.addr %s381, 64
        %s383 = scalar_lea.vmem [#allocation6], %s382
        // Predicated region
        $region86: #{curricular_face_loss.1} parent=84 // pred_check
          %p384 = pneg %p161
        $region87: #{curricular_face_loss.1} parent=84 // pred_check_branch
          %386 = sbr.rel (%p384) target = $region89
        $region88: #{curricular_face_loss.1} parent=84 // pred_region
          _
        $region89: #{curricular_face_loss.1} parent=84 // pred_fallthru
          _
        %p387 = pneg %p47
        %p388 = pneg %p44
        %p389 = pneg %p68
        %p390 = pneg %p65
        %p391 = pneg %p89
        %p392 = pneg %p86
        %p393 = pneg %p110
        %p394 = pneg %p107
        %p395 = pneg %p131
        %p396 = pneg %p128
        %s397 = sand.u32 %s148, 1
        %s398 = sand.u32 %s148, 1
        %s399 = smul.addr %s398, 64
        %s400 = scalar_lea.vmem [#allocation6], %s399
        %p401 = pneg %p161
        %p402 = pneg %p158
        %s403 = smul.u32 %s23, 2
        %s404 = sadd.s32 %s403, %s24
        %p405 = scmp.lt.s32.totalorder %s404, 3
        %s406 = scalar_select %p405, %s404, 3
        %s407 = scalar_lea.vmem %s6, %s406
        %p408 = pneg %p191
        %p409 = pneg %p188
        %p410 = pneg %p217
        %p411 = pneg %p214
        %p412 = scmp.lt.s32.totalorder %s23, 1
        %s413 = scalar_select %p412, %s23, 1
        %s414 = smul.addr %s413, 8
        %s415 = scalar_lea.vmem %s7, %s414
        %s416 = smul.u32 %s23, 2
        %s417 = sadd.s32 %s416, %s24
        %s418 = smul.u32 %s23, 2
        %s419 = sadd.s32 %s418, %s24
        %p420 = scmp.lt.s32.totalorder %s419, 3
        %s421 = scalar_select %p420, %s419, 3
        %s422 = scalar_lea.vmem %s6, %s421
        %s423 = smul.u32 %s23, 2
        %s424 = sadd.s32 %s423, %s24
        %p425 = scmp.lt.s32.totalorder %s23, 1
        %s426 = scalar_select %p425, %s23, 1
        %s427 = smul.addr %s426, 8
        %s428 = scalar_lea.vmem %s7, %s427
        %p430 = scmp.eq.s32.totalorder %s24, 0
        // Predicated region
        $region90: #{curricular_face_loss.1} parent=84 // pred_check
          %p431 = pneg %p430
        $region91: #{curricular_face_loss.1} parent=84 // pred_check_branch
          %433 = sbr.rel (%p431) target = $region93
        $region92: #{curricular_face_loss.1} parent=84 // pred_region
          %vm434 = vcmask 7168
          %435 = vst.msk [vmem:[#allocation2] sm:$0xff] %vm434, -inf
          %436 = vst.msk [vmem:[#allocation3] sm:$0xff] %vm434, 0.0
          %437 = vst.msk [vmem:[#allocation4] sm:$0xff] %vm434, 0.0
        $region93: #{curricular_face_loss.1} parent=84 // pred_fallthru
          _
        %v438 = vld [vmem:[%s0] sm:$0xf]
        %v439 = vld [vmem:[%s383] sm:$0xf]
        %v440 = vld [vmem:[%s383 + $0x4] sm:$0xf]
        %v441 = vld [vmem:[%s383 + $0x8] sm:$0xf]
        %v442 = vld [vmem:[%s383 + $0xc] sm:$0xf]
        %v443 = vld [vmem:[%s383 + $0x10] sm:$0xf]
        %v444 = vld [vmem:[%s383 + $0x14] sm:$0xf]
        %v445 = vld [vmem:[%s383 + $0x18] sm:$0xf]
        %v446 = vld [vmem:[%s383 + $0x1c] sm:$0xf]
        %v447 = vld [vmem:[%s383 + $0x20] sm:$0xf]
        %v448 = vld [vmem:[%s383 + $0x24] sm:$0xf]
        %v449 = vld [vmem:[%s383 + $0x28] sm:$0xf]
        %v450 = vld [vmem:[%s383 + $0x2c] sm:$0xf]
        %v451 = vld [vmem:[%s383 + $0x30] sm:$0xf]
        %v452 = vld [vmem:[%s383 + $0x34] sm:$0xf]
        %v453 = vld [vmem:[%s383 + $0x38] sm:$0xf]
        %v454 = vld [vmem:[%s383 + $0x3c] sm:$0xf]
        %v471 = vunpack.c.l.b16 %v439
        %v472 = vunpack.c.l.b16 %v440
        %v473 = vunpack.c.l.b16 %v441
        %v474 = vunpack.c.l.b16 %v442
        %v475 = vunpack.c.l.b16 %v443
        %v476 = vunpack.c.l.b16 %v444
        %v477 = vunpack.c.l.b16 %v445
        %v478 = vunpack.c.l.b16 %v446
        %v479 = vunpack.c.l.b16 %v447
        %v480 = vunpack.c.l.b16 %v448
        %v481 = vunpack.c.l.b16 %v449
        %v482 = vunpack.c.l.b16 %v450
        %v483 = vunpack.c.l.b16 %v451
        %v484 = vunpack.c.l.b16 %v452
        %v485 = vunpack.c.l.b16 %v453
        %v486 = vunpack.c.l.b16 %v454
        %v487 = vpack.c.b16 %v472, %v471
        %v488 = vpack.c.b16 %v474, %v473
        %v489 = vpack.c.b16 %v476, %v475
        %v490 = vpack.c.b16 %v478, %v477
        %v491 = vpack.c.b16 %v480, %v479
        %v492 = vpack.c.b16 %v482, %v481
        %v493 = vpack.c.b16 %v484, %v483
        %v494 = vpack.c.b16 %v486, %v485
        %503 = vmatprep.subr.bf16.mxu0 0
        %504 = vmatpush1.bf16.msra.mxu0 %v494
        %505 = vmatprep.subr.bf16.mxu0 0
        %506 = vmatpush1.bf16.msra.mxu0 %v493
        %507 = vmatprep.subr.bf16.mxu0 0
        %508 = vmatpush1.bf16.msra.mxu0 %v492
        %509 = vmatprep.subr.bf16.mxu0 0
        %510 = vmatpush1.bf16.msra.mxu0 %v491
        %511 = vmatprep.subr.bf16.mxu0 0
        %512 = vmatpush1.bf16.msra.mxu0 %v490
        %513 = vmatprep.subr.bf16.mxu0 0
        %514 = vmatpush1.bf16.msra.mxu0 %v489
        %515 = vmatprep.subr.bf16.mxu0 0
        %516 = vmatpush1.bf16.msra.mxu0 %v488
        %517 = vmatprep.subr.bf16.mxu0 0
        %518 = vmatpush1.bf16.msra.mxu0 %v487
        %519 = vmatprep.subr.bf16.mxu0 0
        %520 = vmatpush2.bf16.msra.mxu0 0
        %521 = vmatprep.subr.bf16.mxu0 0
        %522 = vmatpush2.bf16.msra.mxu0 0
        %523 = vmatprep.subr.bf16.mxu0 0
        %524 = vmatpush2.bf16.msra.mxu0 0
        %525 = vmatprep.subr.bf16.mxu0 0
        %526 = vmatpush2.bf16.msra.mxu0 0
        %527 = vmatprep.subr.bf16.mxu0 0
        %528 = vmatpush2.bf16.msra.mxu0 0
        %529 = vmatprep.subr.bf16.mxu0 0
        %530 = vmatpush2.bf16.msra.mxu0 0
        %531 = vmatprep.subr.bf16.mxu0 0
        %532 = vmatpush2.bf16.msra.mxu0 0
        %533 = vmatprep.subr.bf16.mxu0 0
        %534 = vmatpush2.bf16.msra.mxu0 0
        %535 = vmatprep.mubr.bf16.mxu0 0
        %536 = vmatmul.mubr.bf16.gmra.mxu0 %v438
        %v537 = vpop.f32.mrf.mxu0
        %v538 = vadd.f32 0.0, %v537
        %v539 = vpop.f32.mrf.mxu0
        %v540 = vpop.f32.mrf.mxu0
        %v541 = vpop.f32.mrf.mxu0
        %542 = vdwg.mxu0
        %v543 = vld [vmem:[%s422] sm:$0x1]
        %v545 = vlaneseq
        %v546 = vshrl.u32 %v545, 7
        %v547 = vsub.s32 0, %v546
        %v548 = vrot.slane %v543, %v547
        %v550 = vmul.f32 %v538, %v548
        %v551 = vmax.f32 %v550, -1.0
        %v552 = vmin.f32 %v551, 1.0
        %s553 = sld [smem:[#allocation5]]
        %v554 = vld [vmem:[%s2] sm:$0xff]
        %556 = vset.pattern.permute.xlu0 0
        %557 = vperm.xlu0 %556, %v554
        %v558 = vpop.permute.xlu0 %557
        %vm560 = vcmp.gt.f32.partialorder %v552, %v558
        %v561 = vstv %s553
        %v562 = vadd.f32 %v561, %v552
        %v563 = vmul.f32 %v552, %v562
        %v564 = vsel %vm560, %v563, %v552
        %v565 = vlaneseq
        %v566 = vand.u32 %v565, 127
        %s567 = smul.u32 %s23, 2
        %s568 = sadd.s32 %s567, %s24
        %s569 = smul.u32 %s568, 128
        %v570 = vld [vmem:[%s1] sm:$0xff]
        %v571 = vstv %s569
        %v572 = vsub.s32 %v570, %v571
        %573 = vset.pattern.permute.xlu0 0
        %574 = vperm.xlu0 %573, %v572
        %v575 = vpop.permute.xlu0 %574
        %vm576 = vcmp.eq.s32.totalorder %v566, %v575
        %v577 = vld [vmem:[%s3] sm:$0xff]
        %579 = vset.pattern.permute.xlu0 0
        %580 = vperm.xlu0 %579, %v577
        %v581 = vpop.permute.xlu0 %580
        %v583 = vsel %vm576, %v581, %v564
        %v584 = vmul.f32 %v583, 64.0
        %v585 = vld [vmem:[#allocation2] sm:$0xff]
        %586 = vmax.xlane.f32.xlu0 %v584
        %v587 = vpop.xlane.xlu0 %586
        %v588 = vmax.f32 %v585, %v587
        %v589 = vsub.f32 %v585, %v588
        %v590 = vmul.f32 %v589, 1.442695
        %v591 = vpow.pop %v590
        %v592 = vld [vmem:[#allocation3] sm:$0xff]
        %v593 = vmul.f32 %v591, %v592
        %595 = vset.pattern.permute.xlu0 0
        %596 = vperm.xlu0 %595, %v588
        %v597 = vpop.permute.xlu0 %596
        %v599 = vsub.f32 %v584, %v597
        %v600 = vmul.f32 %v599, 1.442695
        %v601 = vpow.pop %v600
        %602 = vadd.xlane.f32.xlu0 %v601
        %v603 = vpop.xlane.xlu0 %602
        %v604 = vadd.f32 %v593, %v603
        %vm605 = vcmask 7168
        %606 = vst.msk [vmem:[#allocation3] sm:$0xff] %vm605, %v604
        %v607 = vld [vmem:[#allocation4] sm:$0xff]
        %608 = vadd.xlane.f32.xlu0 %v584
        %v609 = vpop.xlane.xlu0 %608
        %v610 = vadd.f32 %v607, %v609
        %611 = vst.msk [vmem:[#allocation4] sm:$0xff] %vm605, %v610
        %612 = vst.msk [vmem:[#allocation2] sm:$0xff] %vm605, %v588
        %p613 = scmp.eq.s32.totalorder %s24, 1
        // Predicated region
        $region94: #{curricular_face_loss.1} parent=84 // pred_check
          %p614 = pneg %p613
        $region95: #{curricular_face_loss.1} parent=84 // pred_check_branch
          %616 = sbr.rel (%p614) target = $region97
        $region96: #{curricular_face_loss.1} parent=84 // pred_region
          %vm617 = vcmp.eq.s32.totalorder %v566, 0
          %v618 = vld [vmem:[#allocation2] sm:$0xff]
          %620 = vset.pattern.permute.xlu0 0
          %621 = vperm.xlu0 %620, %v618
          %v622 = vpop.permute.xlu0 %621
          %v624 = vsel %vm617, %v622, 0.0
          %vm625 = vcmp.eq.s32.totalorder %v566, 1
          %v626 = vld [vmem:[#allocation3] sm:$0xff]
          %628 = vset.pattern.permute.xlu0 0
          %629 = vperm.xlu0 %628, %v626
          %v630 = vpop.permute.xlu0 %629
          %v632 = vsel %vm625, %v630, 0.0
          %v633 = vadd.f32 %v624, %v632
          %vm634 = vcmp.eq.s32.totalorder %v566, 2
          %v635 = vld [vmem:[#allocation4] sm:$0xff]
          %637 = vset.pattern.permute.xlu0 0
          %638 = vperm.xlu0 %637, %v635
          %v639 = vpop.permute.xlu0 %638
          %v641 = vsel %vm634, %v639, 0.0
          %v642 = vadd.f32 %v633, %v641
          %643 = vst [vmem:[%s428] sm:$0xff] %v642
        $region97: #{curricular_face_loss.1} parent=84 // pred_fallthru
          _
        %p644 = scmp.lt.s32.totalorder %s23, 1
        %s645 = scalar_select %p644, %s23, 1
        %s646 = smul.addr %s645, 8
        %s647 = scalar_lea.vmem %s7, %s646
        // Predicated region
        $region98: #{curricular_face_loss.1} parent=84 // pred_check
          %p648 = pneg %p214
        $region99: #{curricular_face_loss.1} parent=84 // pred_check_branch
          %650 = sbr.rel (%p648) target = $region101
        $region100: #{curricular_face_loss.1} parent=84 // pred_region
          _
        $region101: #{curricular_face_loss.1} parent=84 // pred_fallthru
          _
      $region85: #{curricular_face_loss.1} parent=5 // pred_fallthru
        _
      %p651 = scmp.le.s32.totalorder 2, %s14
      // Predicated region
      $region102: #{curricular_face_loss.1} parent=5 // pred_check
        %p652 = pneg %p651
      $region103: #{curricular_face_loss.1} parent=5 // pred_check_branch
        %654 = sbr.rel (%p652) target = $region105
      $region104: #{curricular_face_loss.1} parent=5 // pred_region
        %s655 = ssub.s32 %s14, 2
        // Predicated region
        $region106: #{curricular_face_loss.1} parent=104 // pred_check
          %p656 = pneg %p220
        $region107: #{curricular_face_loss.1} parent=104 // pred_check_branch
          %658 = sbr.rel (%p656) target = $region109
        $region108: #{curricular_face_loss.1} parent=104 // pred_region
          %p659 = scmp.lt.s32.totalorder %s25, 1
          %s660 = scalar_select %p659, %s25, 1
          %s661 = smul.addr %s660, 8
          %s662 = scalar_lea.vmem %s7, %s661
        $region109: #{curricular_face_loss.1} parent=104 // pred_fallthru
          _
      $region105: #{curricular_face_loss.1} parent=5 // pred_fallthru
        _
    $region6: #{curricular_face_loss.1} parent=1 // loop_footer
      %s18 = sadd.s32 1, %s14
    $region7: #{curricular_face_loss.1} parent=1 // loop_footer_branch
      %13 = sbr.rel target = $region3
    $region8: #{curricular_face_loss.1} parent=1 // loop_exit
      _

</llo_original>
